<compile_context>
chip_gen: v5e
topology: v5e:2x2
jax: 0.10.0
libtpu: 0.0.40
codegen_flags: <defaults>
</compile_context>

<pallas_src>
import functools

import numpy as np
import jax
import jax.numpy as jnp
from jax.experimental import pallas as pl
from jax.experimental.pallas import tpu as pltpu


def _fold_kernel(planes_ref, inv_ref, out_ref, acc_ref, *, psize, window):
    """planes_ref: (TN, psize**2, W, W); inv_ref: (1, S, S); out_ref: (TN, S, S); acc_ref: f32 (TN, S, S)."""
    acc_ref[...] = jnp.zeros_like(acc_ref)
    # Overlap-add: plane k = (i, j) lands at spatial offset (i, j).  psize**2 is small -> unrolled.
    for i in range(psize):
        for j in range(psize):
            k = i * psize + j
            plane = planes_ref[:, k, :, :].astype(jnp.float32)        # (TN, W, W)
            acc_ref[:, i:i + window, j:j + window] += plane
    # Average step: VPU multiply by the precomputed 1/overlap_count instead of a per-pixel divide.
    out_ref[...] = (acc_ref[...] * inv_ref[...]).astype(out_ref.dtype)


def _pick_tile_n(n_images, psize, window, image_size, in_bytes, out_bytes,
                 vmem_budget_bytes=24 * 2**20):
    """Largest divisor of n_images whose (double-buffered) VMEM footprint fits the budget."""
    def pad(a, m):
        return -(-a // m) * m
    planes_b = psize * psize * pad(window, 8) * pad(window, 128) * in_bytes
    out_b = pad(image_size, 8) * pad(image_size, 128) * out_bytes
    acc_b = pad(image_size, 8) * pad(image_size, 128) * 4
    per_img = 2 * (planes_b + out_b) + acc_b          # x2: double buffering of pipelined I/O
    tn = int(max(1, min(n_images, vmem_budget_bytes // max(per_img, 1))))
    while n_images % tn:
        tn -= 1
    return tn


class Patch2ImagePallas:
    """Drop-in forward for the PyTorch `patch2image` module (mode='ave')."""

    def __init__(self, image_size=4, psize=2, stride=1):
        window = image_size + 1 - psize
        m = np.arange(window * window, dtype=np.int64).reshape(window, window)
        cur = np.arange(0, window, stride)
        if cur[-1] != window - 1:
            cur = np.concatenate([cur, np.array([window - 1])])
        m = m[cur, :][:, cur]
        self.mask = m.reshape(-1).astype(np.int32)
        self.psize = int(psize)
        self.window = int(window)
        self.image_size = int(image_size)
        self.identity_mask = bool(
            self.mask.shape[0] == window * window
            and np.array_equal(self.mask, np.arange(window * window)))

        # Overlap counts (== ave_mask_com), then reciprocal (guarded against zero-coverage pixels,
        # which the torch reference would turn into inf/nan).
        ind = np.zeros((window * window,), np.float32)
        ind[self.mask] = 1.0
        ind = ind.reshape(window, window)
        counts = np.zeros((image_size, image_size), np.float32)
        for i in range(psize):
            for j in range(psize):
                counts[i:i + window, j:j + window] += ind
        inv = np.where(counts > 0.0, 1.0 / np.maximum(counts, 1e-30), 0.0).astype(np.float32)
        self.counts = counts
        self.inv_ave = jnp.asarray(inv[None, :, :])                   # (1, S, S)

    def __call__(self, x, channels):
        """x: (B*channels, len(mask), psize**2)  ->  (B, channels, image_size, image_size)."""
        n_images = x.shape[0]
        p, w, s = self.psize, self.window, self.image_size
        assert x.shape[1] == self.mask.shape[0] and x.shape[2] == p * p
        assert n_images % channels == 0

        if self.identity_mask:
            patch_full = x                        # default stride=1: the mask scatter is a no-op
        else:
            # TODO(synk): fuse this scatter into the pallas_call (scalar-prefetched mask indices +
            # row gather in the input index_map) instead of one XLA pass over HBM.
            patch_full = jnp.zeros((n_images, w * w, p * p), x.dtype).at[:, self.mask, :].set(x)

        # (N, W*W, p*p) -> (N, p*p, W, W): put each in-patch offset's plane in its own major slot so
        # the kernel only slices major dims (no in-kernel lane relayout of a non-128-aligned W).
        planes = jnp.transpose(patch_full.reshape(n_images, w, w, p * p), (0, 3, 1, 2))

        tn = _pick_tile_n(n_images, p, w, s, planes.dtype.itemsize, x.dtype.itemsize)
        grid = (n_images // tn,)

        kernel = functools.partial(_fold_kernel, psize=p, window=w)
        out = pl.pallas_call(
            kernel,
            out_shape=jax.ShapeDtypeStruct((n_images, s, s), x.dtype),
            grid_spec=pltpu.PrefetchScalarGridSpec(
                num_scalar_prefetch=0,
                grid=grid,
                in_specs=[
                    pl.BlockSpec((tn, p * p, w, w), lambda n: (n, 0, 0, 0)),
                    pl.BlockSpec((1, s, s), lambda n: (0, 0, 0)),
                ],
                out_specs=pl.BlockSpec((tn, s, s), lambda n: (n, 0, 0)),
                scratch_shapes=[pltpu.VMEM((tn, s, s), jnp.float32)],
            ),
            compiler_params=pltpu.CompilerParams(
                dimension_semantics=("parallel",),
                vmem_limit_bytes=64 * 1024 * 1024,
            ),
        )(planes, self.inv_ave)

        return out.reshape(n_images // channels, channels, s, s)


def _reference_forward(x, mask, psize, window, image_size, counts, channels):
    """Pure-JAX mirror of the PyTorch to_image(..., mode='ave')."""
    n_images = x.shape[0]
    b = n_images // channels
    patch_set = jnp.zeros((n_images, window * window, psize * psize), jnp.float32)
    patch_set = patch_set.at[:, mask, :].set(x.astype(jnp.float32))
    out = jnp.zeros((b, channels, image_size, image_size), jnp.float32)
    for i in range(psize):
        for j in range(psize):
            k = i * psize + j
            t = patch_set[:, :, k].reshape(b, channels, window, window)
            out = out.at[:, :, i:i + window, j:j + window].add(t)
    return out / jnp.asarray(counts)[None, None]


if __name__ == "__main__":
    batch, channels, image_size, psize, stride = 2, 4, 16, 2, 1
    mod = Patch2ImagePallas(image_size=image_size, psize=psize, stride=stride)

    n_patches = int(mod.mask.shape[0])                       # W*W = 225 for stride=1
    key = jax.random.PRNGKey(0)
    x = jax.random.normal(key, (batch * channels, n_patches, psize * psize), dtype=jnp.float32)

    y = mod(x, channels=channels)
    y = jax.block_until_ready(y)
    assert y.shape == (batch, channels, image_size, image_size), y.shape

    y_ref = _reference_forward(x, jnp.asarray(mod.mask), psize, mod.window,
                               image_size, mod.counts, channels)
    err = float(jnp.max(jnp.abs(y.astype(jnp.float32) - y_ref)))
    if err < 1e-4:
        print("KERNEL_OK")
    else:
        print(f"MISMATCH max_abs_err={err}")
</pallas_src>

<mosaic_0001>
module attributes {stable_mosaic.version = 11 : i64} {
  func.func @_fold_kernel(%arg0: i32, %arg1: memref<8x4x15x15xf32, #tpu.memory_space<vmem>>, %arg2: memref<1x16x16xf32, #tpu.memory_space<vmem>>, %arg3: memref<8x16x16xf32, #tpu.memory_space<vmem>>, %arg4: memref<8x16x16xf32, #tpu.memory_space<vmem>>) attributes {dimension_semantics = [#tpu.dimension_semantics<parallel>], iteration_bounds = array<i64: 1>, scalar_prefetch = 0 : i64, scratch_operands = 1 : i64, tpu.core_type = #tpu.core_type<tc>, window_params = [{transform_indices = @transform_0, window_bounds = array<i64: 8, 4, 15, 15>}, {pipeline_mode = #tpu.pipeline_mode<synchronous>, transform_indices = @transform_1, window_bounds = array<i64: 1, 16, 16>}, {transform_indices = @transform_2, window_bounds = array<i64: 8, 16, 16>}]} {
    %cst = arith.constant 0.000000e+00 : f32
    %0 = vector.broadcast %cst : f32 to vector<8x16x16xf32>
    %c0 = arith.constant 0 : index
    %c0_0 = arith.constant 0 : index
    %c0_1 = arith.constant 0 : index
    %1 = vector.load %arg4[%c0, %c0_0, %c0_1] : memref<8x16x16xf32, #tpu.memory_space<vmem>>, vector<8x16x16xf32>
    tpu.vector_store %arg4[%c0, %c0_0, %c0_1], %0 {strides = array<i32>} : memref<8x16x16xf32, #tpu.memory_space<vmem>>, vector<8x16x16xf32>,
    %c0_2 = arith.constant 0 : index
    %c0_3 = arith.constant 0 : index
    %c0_4 = arith.constant 0 : index
    %c0_5 = arith.constant 0 : index
    %2 = vector.load %arg1[%c0_2, %c0_3, %c0_4, %c0_5] : memref<8x4x15x15xf32, #tpu.memory_space<vmem>>, vector<8x1x15x15xf32>
    %3 = vector.shape_cast %2 : vector<8x1x15x15xf32> to vector<8x15x15xf32>
    %c0_6 = arith.constant 0 : index
    %c0_7 = arith.constant 0 : index
    %c0_8 = arith.constant 0 : index
    %4 = vector.load %arg4[%c0_6, %c0_7, %c0_8] : memref<8x16x16xf32, #tpu.memory_space<vmem>>, vector<8x15x15xf32>
    %5 = arith.addf %4, %3 : vector<8x15x15xf32>
    %c0_9 = arith.constant 0 : index
    %c0_10 = arith.constant 0 : index
    %c0_11 = arith.constant 0 : index
    %6 = vector.load %arg4[%c0_9, %c0_10, %c0_11] : memref<8x16x16xf32, #tpu.memory_space<vmem>>, vector<8x15x15xf32>
    tpu.vector_store %arg4[%c0_9, %c0_10, %c0_11], %5 {strides = array<i32>} : memref<8x16x16xf32, #tpu.memory_space<vmem>>, vector<8x15x15xf32>,
    %c0_12 = arith.constant 0 : index
    %c1 = arith.constant 1 : index
    %c0_13 = arith.constant 0 : index
    %c0_14 = arith.constant 0 : index
    %7 = vector.load %arg1[%c0_12, %c1, %c0_13, %c0_14] : memref<8x4x15x15xf32, #tpu.memory_space<vmem>>, vector<8x1x15x15xf32>
    %8 = vector.shape_cast %7 : vector<8x1x15x15xf32> to vector<8x15x15xf32>
    %c0_15 = arith.constant 0 : index
    %c0_16 = arith.constant 0 : index
    %c1_17 = arith.constant 1 : index
    %9 = vector.load %arg4[%c0_15, %c0_16, %c1_17] : memref<8x16x16xf32, #tpu.memory_space<vmem>>, vector<8x15x15xf32>
    %10 = arith.addf %9, %8 : vector<8x15x15xf32>
    %c0_18 = arith.constant 0 : index
    %c0_19 = arith.constant 0 : index
    %c1_20 = arith.constant 1 : index
    %11 = vector.load %arg4[%c0_18, %c0_19, %c1_20] : memref<8x16x16xf32, #tpu.memory_space<vmem>>, vector<8x15x15xf32>
    tpu.vector_store %arg4[%c0_18, %c0_19, %c1_20], %10 {strides = array<i32>} : memref<8x16x16xf32, #tpu.memory_space<vmem>>, vector<8x15x15xf32>,
    %c0_21 = arith.constant 0 : index
    %c2 = arith.constant 2 : index
    %c0_22 = arith.constant 0 : index
    %c0_23 = arith.constant 0 : index
    %12 = vector.load %arg1[%c0_21, %c2, %c0_22, %c0_23] : memref<8x4x15x15xf32, #tpu.memory_space<vmem>>, vector<8x1x15x15xf32>
    %13 = vector.shape_cast %12 : vector<8x1x15x15xf32> to vector<8x15x15xf32>
    %c0_24 = arith.constant 0 : index
    %c1_25 = arith.constant 1 : index
    %c0_26 = arith.constant 0 : index
    %14 = vector.load %arg4[%c0_24, %c1_25, %c0_26] : memref<8x16x16xf32, #tpu.memory_space<vmem>>, vector<8x15x15xf32>
    %15 = arith.addf %14, %13 : vector<8x15x15xf32>
    %c0_27 = arith.constant 0 : index
    %c1_28 = arith.constant 1 : index
    %c0_29 = arith.constant 0 : index
    %16 = vector.load %arg4[%c0_27, %c1_28, %c0_29] : memref<8x16x16xf32, #tpu.memory_space<vmem>>, vector<8x15x15xf32>
    tpu.vector_store %arg4[%c0_27, %c1_28, %c0_29], %15 {strides = array<i32>} : memref<8x16x16xf32, #tpu.memory_space<vmem>>, vector<8x15x15xf32>,
    %c0_30 = arith.constant 0 : index
    %c3 = arith.constant 3 : index
    %c0_31 = arith.constant 0 : index
    %c0_32 = arith.constant 0 : index
    %17 = vector.load %arg1[%c0_30, %c3, %c0_31, %c0_32] : memref<8x4x15x15xf32, #tpu.memory_space<vmem>>, vector<8x1x15x15xf32>
    %18 = vector.shape_cast %17 : vector<8x1x15x15xf32> to vector<8x15x15xf32>
    %c0_33 = arith.constant 0 : index
    %c1_34 = arith.constant 1 : index
    %c1_35 = arith.constant 1 : index
    %19 = vector.load %arg4[%c0_33, %c1_34, %c1_35] : memref<8x16x16xf32, #tpu.memory_space<vmem>>, vector<8x15x15xf32>
    %20 = arith.addf %19, %18 : vector<8x15x15xf32>
    %c0_36 = arith.constant 0 : index
    %c1_37 = arith.constant 1 : index
    %c1_38 = arith.constant 1 : index
    %21 = vector.load %arg4[%c0_36, %c1_37, %c1_38] : memref<8x16x16xf32, #tpu.memory_space<vmem>>, vector<8x15x15xf32>
    tpu.vector_store %arg4[%c0_36, %c1_37, %c1_38], %20 {strides = array<i32>} : memref<8x16x16xf32, #tpu.memory_space<vmem>>, vector<8x15x15xf32>,
    %c0_39 = arith.constant 0 : index
    %c0_40 = arith.constant 0 : index
    %c0_41 = arith.constant 0 : index
    %22 = vector.load %arg4[%c0_39, %c0_40, %c0_41] : memref<8x16x16xf32, #tpu.memory_space<vmem>>, vector<8x16x16xf32>
    %c0_42 = arith.constant 0 : index
    %c0_43 = arith.constant 0 : index
    %c0_44 = arith.constant 0 : index
    %23 = vector.load %arg2[%c0_42, %c0_43, %c0_44] : memref<1x16x16xf32, #tpu.memory_space<vmem>>, vector<1x16x16xf32>
    %24 = vector.broadcast %23 : vector<1x16x16xf32> to vector<8x16x16xf32>
    %25 = arith.mulf %22, %24 : vector<8x16x16xf32>
    %c0_45 = arith.constant 0 : index
    %c0_46 = arith.constant 0 : index
    %c0_47 = arith.constant 0 : index
    %26 = vector.load %arg3[%c0_45, %c0_46, %c0_47] : memref<8x16x16xf32, #tpu.memory_space<vmem>>, vector<8x16x16xf32>
    tpu.vector_store %arg3[%c0_45, %c0_46, %c0_47], %25 {strides = array<i32>} : memref<8x16x16xf32, #tpu.memory_space<vmem>>, vector<8x16x16xf32>,
    return
  }
  func.func @transform_0(%arg0: i32) -> (i32, i32, i32, i32) {
    %c0_i32 = arith.constant 0 : i32
    %c0_i32_0 = arith.constant 0 : i32
    %c0_i32_1 = arith.constant 0 : i32
    %c0_i32_2 = arith.constant 0 : i32
    return %arg0, %c0_i32, %c0_i32_0, %c0_i32_1 : i32, i32, i32, i32
  }
  func.func @transform_1(%arg0: i32) -> (i32, i32, i32) {
    %c0_i32 = arith.constant 0 : i32
    %c0_i32_0 = arith.constant 0 : i32
    %c0_i32_1 = arith.constant 0 : i32
    %c0_i32_2 = arith.constant 0 : i32
    return %c0_i32, %c0_i32_0, %c0_i32_1 : i32, i32, i32
  }
  func.func @transform_2(%arg0: i32) -> (i32, i32, i32) {
    %c0_i32 = arith.constant 0 : i32
    %c0_i32_0 = arith.constant 0 : i32
    %c0_i32_1 = arith.constant 0 : i32
    return %arg0, %c0_i32, %c0_i32_0 : i32, i32, i32
  }
}

</mosaic_0001>

<llo_original>
// kernel: tpu_custom_call.1
$region0: #{tpu_custom_call.1}
  #allocation0 [shape = 'u32[]', space=smem, size = 0x4, offset = 0x4, fixed_abs, tag = 'smem constant byte address 0x4 - core index']
  #allocation1 [shape = 'u32[72,128]{1,0:T(1,128)}', space=vmem, size = 0x9000, scoped, tag = 'internal scratch']
  #allocation2 [shape = 'f32[8,16,16]{2,1,0:T(8,128)}', space=vmem, size = 0x10000, scoped, tag = 'scratch operand']
  %s0 = inlined_call_operand.vmem [shape: f32[8,4,15,15], index: 0, kind: input, shape index: {}]
  %s1 = inlined_call_operand.vmem [shape: f32[1,16,16], index: 1, kind: input, shape index: {}]
  %s2 = inlined_call_operand.hbm [shape: f32[8,16,16], index: 2, kind: output, shape index: {}]
  %s3 = sld [smem:[#allocation0]]
  $region18: #{tpu_custom_call.1} parent=0
    _
  %s5 = ssub.s32 1, %s3
  %s6 = scalar_select 0, %s5, %s3
  $region1: #{tpu_custom_call.1} parent=0
    #allocation3 [shape = 'u8[65536]{0}', space=vmem, size = 0x10000, scoped, tag = 'output window, operand 0, single buffered']
    #allocation4 [shape = 's32[1]{0}', space=sflag, size = 0x4, scoped, tag = 'scoped memory for tpu_custom_call.1']
    %7 = vsyncpa [#allocation4], 0
    // Predicated region
    $region2: #{tpu_custom_call.1} parent=1 // pred_check
      _
    $region3: #{tpu_custom_call.1} parent=1 // pred_check_branch
      %9 = sbr.rel (0) target = $region5
    $region4: #{tpu_custom_call.1} parent=1 // pred_region
      _
    $region5: #{tpu_custom_call.1} parent=1 // pred_fallthru
      _
    // Predicated region
    $region6: #{tpu_custom_call.1} parent=1 // pred_check
      _
    $region7: #{tpu_custom_call.1} parent=1 // pred_check_branch
      %11 = sbr.rel (0) target = $region9
    $region8: #{tpu_custom_call.1} parent=1 // pred_region
      _
    $region9: #{tpu_custom_call.1} parent=1 // pred_fallthru
      _
    %vm12 = vcmask 130048
    %13 = vst.msk [vmem:[#allocation2] sm:$0xff] %vm12, 0.0
    %14 = vst.msk [vmem:[#allocation2 + $0x8] sm:$0xff] %vm12, 0.0
    %15 = vst.msk [vmem:[#allocation2 + $0x10] sm:$0xff] %vm12, 0.0
    %16 = vst.msk [vmem:[#allocation2 + $0x18] sm:$0xff] %vm12, 0.0
    %17 = vst.msk [vmem:[#allocation2 + $0x20] sm:$0xff] %vm12, 0.0
    %18 = vst.msk [vmem:[#allocation2 + $0x28] sm:$0xff] %vm12, 0.0
    %19 = vst.msk [vmem:[#allocation2 + $0x30] sm:$0xff] %vm12, 0.0
    %20 = vst.msk [vmem:[#allocation2 + $0x38] sm:$0xff] %vm12, 0.0
    %21 = vst.msk [vmem:[#allocation2 + $0x40] sm:$0xff] %vm12, 0.0
    %22 = vst.msk [vmem:[#allocation2 + $0x48] sm:$0xff] %vm12, 0.0
    %23 = vst.msk [vmem:[#allocation2 + $0x50] sm:$0xff] %vm12, 0.0
    %24 = vst.msk [vmem:[#allocation2 + $0x58] sm:$0xff] %vm12, 0.0
    %25 = vst.msk [vmem:[#allocation2 + $0x60] sm:$0xff] %vm12, 0.0
    %26 = vst.msk [vmem:[#allocation2 + $0x68] sm:$0xff] %vm12, 0.0
    %27 = vst.msk [vmem:[#allocation2 + $0x70] sm:$0xff] %vm12, 0.0
    %28 = vst.msk [vmem:[#allocation2 + $0x78] sm:$0xff] %vm12, 0.0
    %v29 = vld [vmem:[%s0] sm:$0xff]
    %v30 = vld [vmem:[%s0 + $0x8] sm:$0x7f]
    %v31 = vld [vmem:[%s0 + $0x40] sm:$0xff]
    %v32 = vld [vmem:[%s0 + $0x48] sm:$0x7f]
    %v33 = vld [vmem:[%s0 + $0x80] sm:$0xff]
    %v34 = vld [vmem:[%s0 + $0x88] sm:$0x7f]
    %v35 = vld [vmem:[%s0 + $0xc0] sm:$0xff]
    %v36 = vld [vmem:[%s0 + $0xc8] sm:$0x7f]
    %v37 = vld [vmem:[%s0 + $0x100] sm:$0xff]
    %v38 = vld [vmem:[%s0 + $0x108] sm:$0x7f]
    %v39 = vld [vmem:[%s0 + $0x140] sm:$0xff]
    %v40 = vld [vmem:[%s0 + $0x148] sm:$0x7f]
    %v41 = vld [vmem:[%s0 + $0x180] sm:$0xff]
    %v42 = vld [vmem:[%s0 + $0x188] sm:$0x7f]
    %v43 = vld [vmem:[%s0 + $0x1c0] sm:$0xff]
    %v44 = vld [vmem:[%s0 + $0x1c8] sm:$0x7f]
    %v45 = vld [vmem:[#allocation2] sm:$0xff]
    %v46 = vld [vmem:[#allocation2 + $0x8] sm:$0x7f]
    %v47 = vld [vmem:[#allocation2 + $0x10] sm:$0xff]
    %v48 = vld [vmem:[#allocation2 + $0x18] sm:$0x7f]
    %v49 = vld [vmem:[#allocation2 + $0x20] sm:$0xff]
    %v50 = vld [vmem:[#allocation2 + $0x28] sm:$0x7f]
    %v51 = vld [vmem:[#allocation2 + $0x30] sm:$0xff]
    %v52 = vld [vmem:[#allocation2 + $0x38] sm:$0x7f]
    %v53 = vld [vmem:[#allocation2 + $0x40] sm:$0xff]
    %v54 = vld [vmem:[#allocation2 + $0x48] sm:$0x7f]
    %v55 = vld [vmem:[#allocation2 + $0x50] sm:$0xff]
    %v56 = vld [vmem:[#allocation2 + $0x58] sm:$0x7f]
    %v57 = vld [vmem:[#allocation2 + $0x60] sm:$0xff]
    %v58 = vld [vmem:[#allocation2 + $0x68] sm:$0x7f]
    %v59 = vld [vmem:[#allocation2 + $0x70] sm:$0xff]
    %v60 = vld [vmem:[#allocation2 + $0x78] sm:$0x7f]
    %v61 = vadd.f32 %v45, %v29
    %v62 = vadd.f32 %v46, %v30
    %v63 = vadd.f32 %v47, %v31
    %v64 = vadd.f32 %v48, %v32
    %v65 = vadd.f32 %v49, %v33
    %v66 = vadd.f32 %v50, %v34
    %v67 = vadd.f32 %v51, %v35
    %v68 = vadd.f32 %v52, %v36
    %v69 = vadd.f32 %v53, %v37
    %v70 = vadd.f32 %v54, %v38
    %v71 = vadd.f32 %v55, %v39
    %v72 = vadd.f32 %v56, %v40
    %v73 = vadd.f32 %v57, %v41
    %v74 = vadd.f32 %v58, %v42
    %v75 = vadd.f32 %v59, %v43
    %v76 = vadd.f32 %v60, %v44
    %vm77 = vcmask 121856
    %78 = vst.msk [vmem:[#allocation2] sm:$0xff] %vm77, %v61
    %vm79 = vcmask 120832
    %80 = vst.msk [vmem:[#allocation2 + $0x8] sm:$0x7f] %vm79, %v62
    %81 = vst.msk [vmem:[#allocation2 + $0x10] sm:$0xff] %vm77, %v63
    %82 = vst.msk [vmem:[#allocation2 + $0x18] sm:$0x7f] %vm79, %v64
    %83 = vst.msk [vmem:[#allocation2 + $0x20] sm:$0xff] %vm77, %v65
    %84 = vst.msk [vmem:[#allocation2 + $0x28] sm:$0x7f] %vm79, %v66
    %85 = vst.msk [vmem:[#allocation2 + $0x30] sm:$0xff] %vm77, %v67
    %86 = vst.msk [vmem:[#allocation2 + $0x38] sm:$0x7f] %vm79, %v68
    %87 = vst.msk [vmem:[#allocation2 + $0x40] sm:$0xff] %vm77, %v69
    %88 = vst.msk [vmem:[#allocation2 + $0x48] sm:$0x7f] %vm79, %v70
    %89 = vst.msk [vmem:[#allocation2 + $0x50] sm:$0xff] %vm77, %v71
    %90 = vst.msk [vmem:[#allocation2 + $0x58] sm:$0x7f] %vm79, %v72
    %91 = vst.msk [vmem:[#allocation2 + $0x60] sm:$0xff] %vm77, %v73
    %92 = vst.msk [vmem:[#allocation2 + $0x68] sm:$0x7f] %vm79, %v74
    %93 = vst.msk [vmem:[#allocation2 + $0x70] sm:$0xff] %vm77, %v75
    %94 = vst.msk [vmem:[#allocation2 + $0x78] sm:$0x7f] %vm79, %v76
    %s95 = scalar_lea.vmem %s0, 16
    %v96 = vld [vmem:[%s95] sm:$0xff]
    %v97 = vld [vmem:[%s95 + $0x8] sm:$0x7f]
    %v98 = vld [vmem:[%s95 + $0x40] sm:$0xff]
    %v99 = vld [vmem:[%s95 + $0x48] sm:$0x7f]
    %v100 = vld [vmem:[%s95 + $0x80] sm:$0xff]
    %v101 = vld [vmem:[%s95 + $0x88] sm:$0x7f]
    %v102 = vld [vmem:[%s95 + $0xc0] sm:$0xff]
    %v103 = vld [vmem:[%s95 + $0xc8] sm:$0x7f]
    %v104 = vld [vmem:[%s95 + $0x100] sm:$0xff]
    %v105 = vld [vmem:[%s95 + $0x108] sm:$0x7f]
    %v106 = vld [vmem:[%s95 + $0x140] sm:$0xff]
    %v107 = vld [vmem:[%s95 + $0x148] sm:$0x7f]
    %v108 = vld [vmem:[%s95 + $0x180] sm:$0xff]
    %v109 = vld [vmem:[%s95 + $0x188] sm:$0x7f]
    %v110 = vld [vmem:[%s95 + $0x1c0] sm:$0xff]
    %v111 = vld [vmem:[%s95 + $0x1c8] sm:$0x7f]
    %v112 = vld [vmem:[#allocation2] sm:$0xff]
    %v113 = vld [vmem:[#allocation2 + $0x8] sm:$0x7f]
    %v114 = vld [vmem:[#allocation2 + $0x10] sm:$0xff]
    %v115 = vld [vmem:[#allocation2 + $0x18] sm:$0x7f]
    %v116 = vld [vmem:[#allocation2 + $0x20] sm:$0xff]
    %v117 = vld [vmem:[#allocation2 + $0x28] sm:$0x7f]
    %v118 = vld [vmem:[#allocation2 + $0x30] sm:$0xff]
    %v119 = vld [vmem:[#allocation2 + $0x38] sm:$0x7f]
    %v120 = vld [vmem:[#allocation2 + $0x40] sm:$0xff]
    %v121 = vld [vmem:[#allocation2 + $0x48] sm:$0x7f]
    %v122 = vld [vmem:[#allocation2 + $0x50] sm:$0xff]
    %v123 = vld [vmem:[#allocation2 + $0x58] sm:$0x7f]
    %v124 = vld [vmem:[#allocation2 + $0x60] sm:$0xff]
    %v125 = vld [vmem:[#allocation2 + $0x68] sm:$0x7f]
    %v126 = vld [vmem:[#allocation2 + $0x70] sm:$0xff]
    %v127 = vld [vmem:[#allocation2 + $0x78] sm:$0x7f]
    %144 = vrot.lane.b32.xlu0 %v96, 1
    %v145 = vpop.permute.xlu0 %144
    %146 = vrot.lane.b32.xlu0 %v97, 1
    %v147 = vpop.permute.xlu0 %146
    %148 = vrot.lane.b32.xlu0 %v98, 1
    %v149 = vpop.permute.xlu0 %148
    %150 = vrot.lane.b32.xlu0 %v99, 1
    %v151 = vpop.permute.xlu0 %150
    %152 = vrot.lane.b32.xlu0 %v100, 1
    %v153 = vpop.permute.xlu0 %152
    %154 = vrot.lane.b32.xlu0 %v101, 1
    %v155 = vpop.permute.xlu0 %154
    %156 = vrot.lane.b32.xlu0 %v102, 1
    %v157 = vpop.permute.xlu0 %156
    %158 = vrot.lane.b32.xlu0 %v103, 1
    %v159 = vpop.permute.xlu0 %158
    %160 = vrot.lane.b32.xlu0 %v104, 1
    %v161 = vpop.permute.xlu0 %160
    %162 = vrot.lane.b32.xlu0 %v105, 1
    %v163 = vpop.permute.xlu0 %162
    %164 = vrot.lane.b32.xlu0 %v106, 1
    %v165 = vpop.permute.xlu0 %164
    %166 = vrot.lane.b32.xlu0 %v107, 1
    %v167 = vpop.permute.xlu0 %166
    %168 = vrot.lane.b32.xlu0 %v108, 1
    %v169 = vpop.permute.xlu0 %168
    %170 = vrot.lane.b32.xlu0 %v109, 1
    %v171 = vpop.permute.xlu0 %170
    %172 = vrot.lane.b32.xlu0 %v110, 1
    %v173 = vpop.permute.xlu0 %172
    %174 = vrot.lane.b32.xlu0 %v111, 1
    %v175 = vpop.permute.xlu0 %174
    %v192 = vadd.f32 %v112, %v145
    %v193 = vadd.f32 %v113, %v147
    %v194 = vadd.f32 %v114, %v149
    %v195 = vadd.f32 %v115, %v151
    %v196 = vadd.f32 %v116, %v153
    %v197 = vadd.f32 %v117, %v155
    %v198 = vadd.f32 %v118, %v157
    %v199 = vadd.f32 %v119, %v159
    %v200 = vadd.f32 %v120, %v161
    %v201 = vadd.f32 %v121, %v163
    %v202 = vadd.f32 %v122, %v165
    %v203 = vadd.f32 %v123, %v167
    %v204 = vadd.f32 %v124, %v169
    %v205 = vadd.f32 %v125, %v171
    %v206 = vadd.f32 %v126, %v173
    %v207 = vadd.f32 %v127, %v175
    %vm208 = vcmask 130056
    %209 = vst.msk [vmem:[#allocation2] sm:$0xff] %vm208, %v192
    %vm210 = vcmask 129032
    %211 = vst.msk [vmem:[#allocation2 + $0x8] sm:$0x7f] %vm210, %v193
    %212 = vst.msk [vmem:[#allocation2 + $0x10] sm:$0xff] %vm208, %v194
    %213 = vst.msk [vmem:[#allocation2 + $0x18] sm:$0x7f] %vm210, %v195
    %214 = vst.msk [vmem:[#allocation2 + $0x20] sm:$0xff] %vm208, %v196
    %215 = vst.msk [vmem:[#allocation2 + $0x28] sm:$0x7f] %vm210, %v197
    %216 = vst.msk [vmem:[#allocation2 + $0x30] sm:$0xff] %vm208, %v198
    %217 = vst.msk [vmem:[#allocation2 + $0x38] sm:$0x7f] %vm210, %v199
    %218 = vst.msk [vmem:[#allocation2 + $0x40] sm:$0xff] %vm208, %v200
    %219 = vst.msk [vmem:[#allocation2 + $0x48] sm:$0x7f] %vm210, %v201
    %220 = vst.msk [vmem:[#allocation2 + $0x50] sm:$0xff] %vm208, %v202
    %221 = vst.msk [vmem:[#allocation2 + $0x58] sm:$0x7f] %vm210, %v203
    %222 = vst.msk [vmem:[#allocation2 + $0x60] sm:$0xff] %vm208, %v204
    %223 = vst.msk [vmem:[#allocation2 + $0x68] sm:$0x7f] %vm210, %v205
    %224 = vst.msk [vmem:[#allocation2 + $0x70] sm:$0xff] %vm208, %v206
    %225 = vst.msk [vmem:[#allocation2 + $0x78] sm:$0x7f] %vm210, %v207
    %s226 = scalar_lea.vmem %s0, 32
    %v227 = vld [vmem:[%s226] sm:$0xff]
    %v228 = vld [vmem:[%s226 + $0x8] sm:$0x7f]
    %v229 = vld [vmem:[%s226 + $0x40] sm:$0xff]
    %v230 = vld [vmem:[%s226 + $0x48] sm:$0x7f]
    %v231 = vld [vmem:[%s226 + $0x80] sm:$0xff]
    %v232 = vld [vmem:[%s226 + $0x88] sm:$0x7f]
    %v233 = vld [vmem:[%s226 + $0xc0] sm:$0xff]
    %v234 = vld [vmem:[%s226 + $0xc8] sm:$0x7f]
    %v235 = vld [vmem:[%s226 + $0x100] sm:$0xff]
    %v236 = vld [vmem:[%s226 + $0x108] sm:$0x7f]
    %v237 = vld [vmem:[%s226 + $0x140] sm:$0xff]
    %v238 = vld [vmem:[%s226 + $0x148] sm:$0x7f]
    %v239 = vld [vmem:[%s226 + $0x180] sm:$0xff]
    %v240 = vld [vmem:[%s226 + $0x188] sm:$0x7f]
    %v241 = vld [vmem:[%s226 + $0x1c0] sm:$0xff]
    %v242 = vld [vmem:[%s226 + $0x1c8] sm:$0x7f]
    %v243 = vld [vmem:[#allocation2 + $0x1] sm:$0xff]
    %v244 = vld [vmem:[#allocation2 + $0x9] sm:$0x7f]
    %v245 = vld [vmem:[#allocation2 + $0x11] sm:$0xff]
    %v246 = vld [vmem:[#allocation2 + $0x19] sm:$0x7f]
    %v247 = vld [vmem:[#allocation2 + $0x21] sm:$0xff]
    %v248 = vld [vmem:[#allocation2 + $0x29] sm:$0x7f]
    %v249 = vld [vmem:[#allocation2 + $0x31] sm:$0xff]
    %v250 = vld [vmem:[#allocation2 + $0x39] sm:$0x7f]
    %v251 = vld [vmem:[#allocation2 + $0x41] sm:$0xff]
    %v252 = vld [vmem:[#allocation2 + $0x49] sm:$0x7f]
    %v253 = vld [vmem:[#allocation2 + $0x51] sm:$0xff]
    %v254 = vld [vmem:[#allocation2 + $0x59] sm:$0x7f]
    %v255 = vld [vmem:[#allocation2 + $0x61] sm:$0xff]
    %v256 = vld [vmem:[#allocation2 + $0x69] sm:$0x7f]
    %v257 = vld [vmem:[#allocation2 + $0x71] sm:$0xff]
    %v258 = vld [vmem:[#allocation2 + $0x79] sm:$0x7f]
    %v259 = vadd.f32 %v243, %v227
    %v260 = vadd.f32 %v244, %v228
    %v261 = vadd.f32 %v245, %v229
    %v262 = vadd.f32 %v246, %v230
    %v263 = vadd.f32 %v247, %v231
    %v264 = vadd.f32 %v248, %v232
    %v265 = vadd.f32 %v249, %v233
    %v266 = vadd.f32 %v250, %v234
    %v267 = vadd.f32 %v251, %v235
    %v268 = vadd.f32 %v252, %v236
    %v269 = vadd.f32 %v253, %v237
    %v270 = vadd.f32 %v254, %v238
    %v271 = vadd.f32 %v255, %v239
    %v272 = vadd.f32 %v256, %v240
    %v273 = vadd.f32 %v257, %v241
    %v274 = vadd.f32 %v258, %v242
    %275 = vst.msk [vmem:[#allocation2 + $0x1] sm:$0xff] %vm77, %v259
    %276 = vst.msk [vmem:[#allocation2 + $0x9] sm:$0x7f] %vm79, %v260
    %277 = vst.msk [vmem:[#allocation2 + $0x11] sm:$0xff] %vm77, %v261
    %278 = vst.msk [vmem:[#allocation2 + $0x19] sm:$0x7f] %vm79, %v262
    %279 = vst.msk [vmem:[#allocation2 + $0x21] sm:$0xff] %vm77, %v263
    %280 = vst.msk [vmem:[#allocation2 + $0x29] sm:$0x7f] %vm79, %v264
    %281 = vst.msk [vmem:[#allocation2 + $0x31] sm:$0xff] %vm77, %v265
    %282 = vst.msk [vmem:[#allocation2 + $0x39] sm:$0x7f] %vm79, %v266
    %283 = vst.msk [vmem:[#allocation2 + $0x41] sm:$0xff] %vm77, %v267
    %284 = vst.msk [vmem:[#allocation2 + $0x49] sm:$0x7f] %vm79, %v268
    %285 = vst.msk [vmem:[#allocation2 + $0x51] sm:$0xff] %vm77, %v269
    %286 = vst.msk [vmem:[#allocation2 + $0x59] sm:$0x7f] %vm79, %v270
    %287 = vst.msk [vmem:[#allocation2 + $0x61] sm:$0xff] %vm77, %v271
    %288 = vst.msk [vmem:[#allocation2 + $0x69] sm:$0x7f] %vm79, %v272
    %289 = vst.msk [vmem:[#allocation2 + $0x71] sm:$0xff] %vm77, %v273
    %290 = vst.msk [vmem:[#allocation2 + $0x79] sm:$0x7f] %vm79, %v274
    %s291 = scalar_lea.vmem %s0, 48
    %v292 = vld [vmem:[%s291] sm:$0xff]
    %v293 = vld [vmem:[%s291 + $0x8] sm:$0x7f]
    %v294 = vld [vmem:[%s291 + $0x40] sm:$0xff]
    %v295 = vld [vmem:[%s291 + $0x48] sm:$0x7f]
    %v296 = vld [vmem:[%s291 + $0x80] sm:$0xff]
    %v297 = vld [vmem:[%s291 + $0x88] sm:$0x7f]
    %v298 = vld [vmem:[%s291 + $0xc0] sm:$0xff]
    %v299 = vld [vmem:[%s291 + $0xc8] sm:$0x7f]
    %v300 = vld [vmem:[%s291 + $0x100] sm:$0xff]
    %v301 = vld [vmem:[%s291 + $0x108] sm:$0x7f]
    %v302 = vld [vmem:[%s291 + $0x140] sm:$0xff]
    %v303 = vld [vmem:[%s291 + $0x148] sm:$0x7f]
    %v304 = vld [vmem:[%s291 + $0x180] sm:$0xff]
    %v305 = vld [vmem:[%s291 + $0x188] sm:$0x7f]
    %v306 = vld [vmem:[%s291 + $0x1c0] sm:$0xff]
    %v307 = vld [vmem:[%s291 + $0x1c8] sm:$0x7f]
    %v308 = vld [vmem:[#allocation2 + $0x1] sm:$0xff]
    %v309 = vld [vmem:[#allocation2 + $0x9] sm:$0x7f]
    %v310 = vld [vmem:[#allocation2 + $0x11] sm:$0xff]
    %v311 = vld [vmem:[#allocation2 + $0x19] sm:$0x7f]
    %v312 = vld [vmem:[#allocation2 + $0x21] sm:$0xff]
    %v313 = vld [vmem:[#allocation2 + $0x29] sm:$0x7f]
    %v314 = vld [vmem:[#allocation2 + $0x31] sm:$0xff]
    %v315 = vld [vmem:[#allocation2 + $0x39] sm:$0x7f]
    %v316 = vld [vmem:[#allocation2 + $0x41] sm:$0xff]
    %v317 = vld [vmem:[#allocation2 + $0x49] sm:$0x7f]
    %v318 = vld [vmem:[#allocation2 + $0x51] sm:$0xff]
    %v319 = vld [vmem:[#allocation2 + $0x59] sm:$0x7f]
    %v320 = vld [vmem:[#allocation2 + $0x61] sm:$0xff]
    %v321 = vld [vmem:[#allocation2 + $0x69] sm:$0x7f]
    %v322 = vld [vmem:[#allocation2 + $0x71] sm:$0xff]
    %v323 = vld [vmem:[#allocation2 + $0x79] sm:$0x7f]
    %340 = vrot.lane.b32.xlu0 %v292, 1
    %v341 = vpop.permute.xlu0 %340
    %342 = vrot.lane.b32.xlu0 %v293, 1
    %v343 = vpop.permute.xlu0 %342
    %344 = vrot.lane.b32.xlu0 %v294, 1
    %v345 = vpop.permute.xlu0 %344
    %346 = vrot.lane.b32.xlu0 %v295, 1
    %v347 = vpop.permute.xlu0 %346
    %348 = vrot.lane.b32.xlu0 %v296, 1
    %v349 = vpop.permute.xlu0 %348
    %350 = vrot.lane.b32.xlu0 %v297, 1
    %v351 = vpop.permute.xlu0 %350
    %352 = vrot.lane.b32.xlu0 %v298, 1
    %v353 = vpop.permute.xlu0 %352
    %354 = vrot.lane.b32.xlu0 %v299, 1
    %v355 = vpop.permute.xlu0 %354
    %356 = vrot.lane.b32.xlu0 %v300, 1
    %v357 = vpop.permute.xlu0 %356
    %358 = vrot.lane.b32.xlu0 %v301, 1
    %v359 = vpop.permute.xlu0 %358
    %360 = vrot.lane.b32.xlu0 %v302, 1
    %v361 = vpop.permute.xlu0 %360
    %362 = vrot.lane.b32.xlu0 %v303, 1
    %v363 = vpop.permute.xlu0 %362
    %364 = vrot.lane.b32.xlu0 %v304, 1
    %v365 = vpop.permute.xlu0 %364
    %366 = vrot.lane.b32.xlu0 %v305, 1
    %v367 = vpop.permute.xlu0 %366
    %368 = vrot.lane.b32.xlu0 %v306, 1
    %v369 = vpop.permute.xlu0 %368
    %370 = vrot.lane.b32.xlu0 %v307, 1
    %v371 = vpop.permute.xlu0 %370
    %v388 = vadd.f32 %v308, %v341
    %v389 = vadd.f32 %v309, %v343
    %v390 = vadd.f32 %v310, %v345
    %v391 = vadd.f32 %v311, %v347
    %v392 = vadd.f32 %v312, %v349
    %v393 = vadd.f32 %v313, %v351
    %v394 = vadd.f32 %v314, %v353
    %v395 = vadd.f32 %v315, %v355
    %v396 = vadd.f32 %v316, %v357
    %v397 = vadd.f32 %v317, %v359
    %v398 = vadd.f32 %v318, %v361
    %v399 = vadd.f32 %v319, %v363
    %v400 = vadd.f32 %v320, %v365
    %v401 = vadd.f32 %v321, %v367
    %v402 = vadd.f32 %v322, %v369
    %v403 = vadd.f32 %v323, %v371
    %404 = vst.msk [vmem:[#allocation2 + $0x1] sm:$0xff] %vm208, %v388
    %405 = vst.msk [vmem:[#allocation2 + $0x9] sm:$0x7f] %vm210, %v389
    %406 = vst.msk [vmem:[#allocation2 + $0x11] sm:$0xff] %vm208, %v390
    %407 = vst.msk [vmem:[#allocation2 + $0x19] sm:$0x7f] %vm210, %v391
    %408 = vst.msk [vmem:[#allocation2 + $0x21] sm:$0xff] %vm208, %v392
    %409 = vst.msk [vmem:[#allocation2 + $0x29] sm:$0x7f] %vm210, %v393
    %410 = vst.msk [vmem:[#allocation2 + $0x31] sm:$0xff] %vm208, %v394
    %411 = vst.msk [vmem:[#allocation2 + $0x39] sm:$0x7f] %vm210, %v395
    %412 = vst.msk [vmem:[#allocation2 + $0x41] sm:$0xff] %vm208, %v396
    %413 = vst.msk [vmem:[#allocation2 + $0x49] sm:$0x7f] %vm210, %v397
    %414 = vst.msk [vmem:[#allocation2 + $0x51] sm:$0xff] %vm208, %v398
    %415 = vst.msk [vmem:[#allocation2 + $0x59] sm:$0x7f] %vm210, %v399
    %416 = vst.msk [vmem:[#allocation2 + $0x61] sm:$0xff] %vm208, %v400
    %417 = vst.msk [vmem:[#allocation2 + $0x69] sm:$0x7f] %vm210, %v401
    %418 = vst.msk [vmem:[#allocation2 + $0x71] sm:$0xff] %vm208, %v402
    %419 = vst.msk [vmem:[#allocation2 + $0x79] sm:$0x7f] %vm210, %v403
    %v420 = vld [vmem:[#allocation2] sm:$0xff]
    %v421 = vld [vmem:[#allocation2 + $0x8] sm:$0xff]
    %v422 = vld [vmem:[#allocation2 + $0x10] sm:$0xff]
    %v423 = vld [vmem:[#allocation2 + $0x18] sm:$0xff]
    %v424 = vld [vmem:[#allocation2 + $0x20] sm:$0xff]
    %v425 = vld [vmem:[#allocation2 + $0x28] sm:$0xff]
    %v426 = vld [vmem:[#allocation2 + $0x30] sm:$0xff]
    %v427 = vld [vmem:[#allocation2 + $0x38] sm:$0xff]
    %v428 = vld [vmem:[#allocation2 + $0x40] sm:$0xff]
    %v429 = vld [vmem:[#allocation2 + $0x48] sm:$0xff]
    %v430 = vld [vmem:[#allocation2 + $0x50] sm:$0xff]
    %v431 = vld [vmem:[#allocation2 + $0x58] sm:$0xff]
    %v432 = vld [vmem:[#allocation2 + $0x60] sm:$0xff]
    %v433 = vld [vmem:[#allocation2 + $0x68] sm:$0xff]
    %v434 = vld [vmem:[#allocation2 + $0x70] sm:$0xff]
    %v435 = vld [vmem:[#allocation2 + $0x78] sm:$0xff]
    %v436 = vld [vmem:[%s1] sm:$0xff]
    %v437 = vld [vmem:[%s1 + $0x8] sm:$0xff]
    %v438 = vmul.f32 %v420, %v436
    %v439 = vmul.f32 %v421, %v437
    %v440 = vmul.f32 %v422, %v436
    %v441 = vmul.f32 %v423, %v437
    %v442 = vmul.f32 %v424, %v436
    %v443 = vmul.f32 %v425, %v437
    %v444 = vmul.f32 %v426, %v436
    %v445 = vmul.f32 %v427, %v437
    %v446 = vmul.f32 %v428, %v436
    %v447 = vmul.f32 %v429, %v437
    %v448 = vmul.f32 %v430, %v436
    %v449 = vmul.f32 %v431, %v437
    %v450 = vmul.f32 %v432, %v436
    %v451 = vmul.f32 %v433, %v437
    %v452 = vmul.f32 %v434, %v436
    %v453 = vmul.f32 %v435, %v437
    %454 = vst.msk [vmem:[#allocation3] sm:$0xff] %vm12, %v438
    %455 = vst.msk [vmem:[#allocation3 + $0x8] sm:$0xff] %vm12, %v439
    %456 = vst.msk [vmem:[#allocation3 + $0x10] sm:$0xff] %vm12, %v440
    %457 = vst.msk [vmem:[#allocation3 + $0x18] sm:$0xff] %vm12, %v441
    %458 = vst.msk [vmem:[#allocation3 + $0x20] sm:$0xff] %vm12, %v442
    %459 = vst.msk [vmem:[#allocation3 + $0x28] sm:$0xff] %vm12, %v443
    %460 = vst.msk [vmem:[#allocation3 + $0x30] sm:$0xff] %vm12, %v444
    %461 = vst.msk [vmem:[#allocation3 + $0x38] sm:$0xff] %vm12, %v445
    %462 = vst.msk [vmem:[#allocation3 + $0x40] sm:$0xff] %vm12, %v446
    %463 = vst.msk [vmem:[#allocation3 + $0x48] sm:$0xff] %vm12, %v447
    %464 = vst.msk [vmem:[#allocation3 + $0x50] sm:$0xff] %vm12, %v448
    %465 = vst.msk [vmem:[#allocation3 + $0x58] sm:$0xff] %vm12, %v449
    %466 = vst.msk [vmem:[#allocation3 + $0x60] sm:$0xff] %vm12, %v450
    %467 = vst.msk [vmem:[#allocation3 + $0x68] sm:$0xff] %vm12, %v451
    %468 = vst.msk [vmem:[#allocation3 + $0x70] sm:$0xff] %vm12, %v452
    %469 = vst.msk [vmem:[#allocation3 + $0x78] sm:$0xff] %vm12, %v453
    // Predicated region
    $region10: #{tpu_custom_call.1} parent=1 // pred_check
      _
    $region11: #{tpu_custom_call.1} parent=1 // pred_check_branch
      %471 = sbr.rel (0) target = $region13
    $region12: #{tpu_custom_call.1} parent=1 // pred_region
      %473 = vsyncadd [#allocation4], 0
      %s474 = sshll.u32 [#allocation3], 4
      %s475 = int_to_ptr.vmem [resolvable:$true] %s474
      %s476 = sshll.u32 %s2, 4
      %s477 = int_to_ptr.hbm [resolvable:$true] %s476
      %482 = dma.vmem_to_hbm [thread:$0]  %s475, 2048, %s477, [#allocation4], 128, 128, 8
    $region13: #{tpu_custom_call.1} parent=1 // pred_fallthru
      _
    // Predicated region
    $region14: #{tpu_custom_call.1} parent=1 // pred_check
      _
    $region15: #{tpu_custom_call.1} parent=1 // pred_check_branch
      %484 = sbr.rel (0) target = $region17
    $region16: #{tpu_custom_call.1} parent=1 // pred_region
      %486 = dma.done [#allocation4], 2048
    $region17: #{tpu_custom_call.1} parent=1 // pred_fallthru
      _
    %487 = vsyncpa [#allocation4], 1

</llo_original>
